<compile_context>
chip_gen: v6e
topology: v6e:2x2x1
jax: 0.10.0
libtpu: 0.0.40
codegen_flags: <defaults>
</compile_context>

<pallas_src>
import jax
import jax.numpy as jnp
from jax.experimental import pallas as pl
from jax.experimental.pallas import tpu as pltpu

_LANE = 128
_SUBLANE = 8
_TB_MAX = 512          # max batch-tile rows (amortizes ~0.35us per-step overhead)


def _round_up(n, m):
    return ((n + m - 1) // m) * m


def _ae_kernel(x_ref, w1_ref, b1_ref, w2_ref, b2_ref,
               w3_ref, b3_ref, w4_ref, b4_ref, o_ref):
    # cast the streamed f32 input tile to bf16 inside the kernel (no extra
    # HBM pass in the wrapper); all matmuls accumulate in f32 on the MXU.
    x = x_ref[...].astype(jnp.bfloat16)
    # encoder: Linear -> ReLU -> Linear -> ReLU
    h1 = jnp.dot(x, w1_ref[...], preferred_element_type=jnp.float32)
    h1 = jnp.maximum(h1 + b1_ref[...], 0.0)
    z = jnp.dot(h1.astype(jnp.bfloat16), w2_ref[...],
                preferred_element_type=jnp.float32)
    z = jnp.maximum(z + b2_ref[...], 0.0)
    # decoder: Linear -> ReLU -> Linear -> Sigmoid
    h2 = jnp.dot(z.astype(jnp.bfloat16), w3_ref[...],
                 preferred_element_type=jnp.float32)
    h2 = jnp.maximum(h2 + b3_ref[...], 0.0)
    y = jnp.dot(h2.astype(jnp.bfloat16), w4_ref[...],
                preferred_element_type=jnp.float32)
    o_ref[...] = jax.nn.sigmoid(y + b4_ref[...]).astype(o_ref.dtype)


def _vmem_capacity_bytes():
    try:
        return int(pltpu.get_tpu_info().vmem_capacity_bytes)
    except Exception:
        return 64 << 20  # conservative fallback (v7x per-TC size)


def _pick_batch_tile(B, d_in, d_out, hid, lat_p, vmem_cap):
    """Largest MXU/VMEM-friendly batch tile; >=2 tiles when B allows (v7x)."""
    if B <= _SUBLANE:
        return B  # block == full array dim; no padding needed
    # rough per-row VMEM cost: double-buffered f32 x, double-buffered f32 out,
    # plus compiler-materialized f32 intermediates.
    per_row = 2 * d_in * 4 + 2 * d_out * 4 + (2 * hid + lat_p + d_out) * 4
    weights = 2 * (d_in * hid + hid * lat_p + lat_p * hid + hid * d_out)
    budget = max((vmem_cap - weights) * 3 // 4, 4 << 20)
    tb_cap = max(_SUBLANE, (budget // per_row) // _SUBLANE * _SUBLANE)
    tb = min(_TB_MAX, tb_cap, _round_up(B, _SUBLANE))
    # guarantee >= 2 grid steps so the "parallel" batch axis can shard across
    # v7x's two TensorCores (no effect on single-TC v5e/v6e).
    if B > 2 * _SUBLANE and pl.cdiv(B, tb) < 2:
        tb = _round_up(pl.cdiv(B, 2), _SUBLANE)
    return tb


def autoencoder_forward(x_nchw, params):
    """x_nchw: (B, C, H, W) float32. Returns (B, H*W) float32."""
    B, C, H, W = x_nchw.shape
    d_in = C * H * W
    w1, b1, w2, b2, w3, b3, w4, b4 = params
    hid = w1.shape[1]
    lat = w2.shape[1]
    d_out = w4.shape[1]

    # --- lane-align the latent dim (e.g. 32 -> 128) with exact zero padding.
    lat_p = _round_up(lat, _LANE)
    if lat_p != lat:
        w2 = jnp.pad(w2, ((0, 0), (0, lat_p - lat)))
        b2 = jnp.pad(b2, ((0, 0), (0, lat_p - lat)))
        w3 = jnp.pad(w3, ((0, lat_p - lat), (0, 0)))

    # --- bf16 resident matmul weights; biases stay f32 (VPU/EUP path).
    w1b, w2b, w3b, w4b = (w.astype(jnp.bfloat16) for w in (w1, w2, w3, w4))
    b1, b2, b3, b4 = (b.astype(jnp.float32) for b in (b1, b2, b3, b4))

    # --- input stays f32; flatten is a metadata-only reshape (no HBM pass).
    x_flat = x_nchw.reshape(B, d_in)
    if x_flat.dtype != jnp.float32:
        x_flat = x_flat.astype(jnp.float32)

    # --- per-chip VMEM budgeting for the batch tile and the scoped limit.
    vmem_cap = _vmem_capacity_bytes()
    tb = _pick_batch_tile(B, d_in, d_out, hid, lat_p, vmem_cap)
    n_tiles = pl.cdiv(B, tb)
    vmem_limit = int(max(32 << 20, min(vmem_cap - (16 << 20), 100 << 20)))

    # --- advisory cost estimate for the surrounding XLA schedule.
    b_eff = n_tiles * tb
    flops = 2 * b_eff * (d_in * hid + hid * lat_p + lat_p * hid + hid * d_out)
    bytes_accessed = (
        x_flat.size * 4
        + sum(w.size * 2 for w in (w1b, w2b, w3b, w4b))
        + sum(b.size * 4 for b in (b1, b2, b3, b4))
        + B * d_out * 4)
    cost = pl.CostEstimate(flops=flops,
                           transcendentals=b_eff * d_out,
                           bytes_accessed=bytes_accessed)

    def resident(shape):
        # constant index_map -> stays in VMEM across all grid iterations
        return pl.BlockSpec(shape, lambda i: (0, 0))

    out = pl.pallas_call(
        _ae_kernel,
        out_shape=jax.ShapeDtypeStruct((B, d_out), jnp.float32),
        grid=(n_tiles,),
        in_specs=[
            pl.BlockSpec((tb, d_in), lambda i: (i, 0)),      # x: tiled over batch
            resident(w1b.shape), resident(b1.shape),
            resident(w2b.shape), resident(b2.shape),
            resident(w3b.shape), resident(b3.shape),
            resident(w4b.shape), resident(b4.shape),
        ],
        out_specs=pl.BlockSpec((tb, d_out), lambda i: (i, 0)),
        compiler_params=pltpu.CompilerParams(
            dimension_semantics=("parallel",),
            vmem_limit_bytes=vmem_limit),
        cost_estimate=cost,
    )(x_flat, w1b, b1, w2b, b2, w3b, b3, w4b, b4)

    return out


def init_params(key, d_in, hid, lat, d_out):
    ks = jax.random.split(key, 4)

    def lin(k, fan_in, fan_out):
        # PyTorch nn.Linear-style uniform init bound
        bound = 1.0 / jnp.sqrt(fan_in)
        kw, kb = jax.random.split(k)
        w = jax.random.uniform(kw, (fan_in, fan_out), jnp.float32, -bound, bound)
        b = jax.random.uniform(kb, (1, fan_out), jnp.float32, -bound, bound)
        return w, b

    w1, b1 = lin(ks[0], d_in, hid)
    w2, b2 = lin(ks[1], hid, lat)
    w3, b3 = lin(ks[2], lat, hid)
    w4, b4 = lin(ks[3], hid, d_out)
    return (w1, b1, w2, b2, w3, b3, w4, b4)


def _reference(x_nchw, params):
    # pure-JAX f32 reference of the same forward pass
    w1, b1, w2, b2, w3, b3, w4, b4 = params
    B = x_nchw.shape[0]
    x = x_nchw.reshape(B, -1)
    h1 = jnp.maximum(x @ w1 + b1, 0.0)
    z = jnp.maximum(h1 @ w2 + b2, 0.0)
    h2 = jnp.maximum(z @ w3 + b3, 0.0)
    return jax.nn.sigmoid(h2 @ w4 + b4)


# TODO(synk): fit/evaluate/fit_wandb/wandb_alert/save_model are host-side
# training & logging loops (optimizer, dataloaders, numpy metrics, wandb,
# torch.save) — not kernel work; only the forward pass is implemented in Pallas.

if __name__ == "__main__":
    B, C, H, W = 2, 2, 16, 16          # small shapes consistent with the module
    HID, LAT = 128, 32
    D_IN, D_OUT = C * H * W, H * W

    key = jax.random.PRNGKey(0)
    kx, kp = jax.random.split(key)
    x = jax.random.normal(kx, (B, C, H, W), dtype=jnp.float32)
    params = init_params(kp, D_IN, HID, LAT, D_OUT)

    y = autoencoder_forward(x, params)
    y = jax.block_until_ready(y)

    y_ref = _reference(x, params)
    assert y.shape == (B, D_OUT)
    # bf16 matmul operands (f32 accumulation) -> loosened tolerance vs f32 ref
    assert jnp.allclose(y, y_ref, atol=2e-2, rtol=2e-2)

    print("KERNEL_OK")
</pallas_src>

<mosaic_0001>
module attributes {stable_mosaic.version = 11 : i64} {
  func.func @_ae_kernel(%arg0: i32, %arg1: memref<2x512xf32, #tpu.memory_space<vmem>>, %arg2: memref<512x128xbf16, #tpu.memory_space<vmem>>, %arg3: memref<1x128xf32, #tpu.memory_space<vmem>>, %arg4: memref<128x128xbf16, #tpu.memory_space<vmem>>, %arg5: memref<1x128xf32, #tpu.memory_space<vmem>>, %arg6: memref<128x128xbf16, #tpu.memory_space<vmem>>, %arg7: memref<1x128xf32, #tpu.memory_space<vmem>>, %arg8: memref<128x256xbf16, #tpu.memory_space<vmem>>, %arg9: memref<1x256xf32, #tpu.memory_space<vmem>>, %arg10: memref<2x256xf32, #tpu.memory_space<vmem>>) attributes {dimension_semantics = [#tpu.dimension_semantics<parallel>], iteration_bounds = array<i64: 1>, scalar_prefetch = 0 : i64, scratch_operands = 0 : i64, tpu.core_type = #tpu.core_type<tc>, window_params = [{transform_indices = @transform_0, window_bounds = array<i64: 2, 512>}, {pipeline_mode = #tpu.pipeline_mode<synchronous>, transform_indices = @transform_1, window_bounds = array<i64: 512, 128>}, {pipeline_mode = #tpu.pipeline_mode<synchronous>, transform_indices = @transform_2, window_bounds = array<i64: 1, 128>}, {pipeline_mode = #tpu.pipeline_mode<synchronous>, transform_indices = @transform_3, window_bounds = array<i64: 128, 128>}, {pipeline_mode = #tpu.pipeline_mode<synchronous>, transform_indices = @transform_4, window_bounds = array<i64: 1, 128>}, {pipeline_mode = #tpu.pipeline_mode<synchronous>, transform_indices = @transform_5, window_bounds = array<i64: 128, 128>}, {pipeline_mode = #tpu.pipeline_mode<synchronous>, transform_indices = @transform_6, window_bounds = array<i64: 1, 128>}, {pipeline_mode = #tpu.pipeline_mode<synchronous>, transform_indices = @transform_7, window_bounds = array<i64: 128, 256>}, {pipeline_mode = #tpu.pipeline_mode<synchronous>, transform_indices = @transform_8, window_bounds = array<i64: 1, 256>}, {transform_indices = @transform_9, window_bounds = array<i64: 2, 256>}]} {
    %c0 = arith.constant 0 : index
    %c0_0 = arith.constant 0 : index
    %0 = vector.load %arg1[%c0, %c0_0] : memref<2x512xf32, #tpu.memory_space<vmem>>, vector<2x512xf32>
    %1 = arith.truncf %0 : vector<2x512xf32> to vector<2x512xbf16>
    %c0_1 = arith.constant 0 : index
    %c0_2 = arith.constant 0 : index
    %2 = vector.load %arg2[%c0_1, %c0_2] : memref<512x128xbf16, #tpu.memory_space<vmem>>, vector<512x128xbf16>
    %cst = arith.constant dense<0.000000e+00> : vector<2x128xf32>
    %3 = tpu.matmul %1, %2, %cst {dimension_numbers = #tpu.dot_dimension_numbers<[1], [0], [0], [1], [0, 0, 1, 1], [], []>} : vector<2x512xbf16>, vector<512x128xbf16>, vector<2x128xf32> -> vector<2x128xf32>
    %c0_3 = arith.constant 0 : index
    %c0_4 = arith.constant 0 : index
    %4 = vector.load %arg3[%c0_3, %c0_4] : memref<1x128xf32, #tpu.memory_space<vmem>>, vector<1x128xf32>
    %5 = vector.broadcast %4 : vector<1x128xf32> to vector<2x128xf32>
    %6 = arith.addf %3, %5 : vector<2x128xf32>
    %cst_5 = arith.constant 0.000000e+00 : f32
    %7 = vector.broadcast %cst_5 : f32 to vector<2x128xf32>
    %8 = arith.maximumf %6, %7 : vector<2x128xf32>
    %9 = arith.truncf %8 : vector<2x128xf32> to vector<2x128xbf16>
    %c0_6 = arith.constant 0 : index
    %c0_7 = arith.constant 0 : index
    %10 = vector.load %arg4[%c0_6, %c0_7] : memref<128x128xbf16, #tpu.memory_space<vmem>>, vector<128x128xbf16>
    %cst_8 = arith.constant dense<0.000000e+00> : vector<2x128xf32>
    %11 = tpu.matmul %9, %10, %cst_8 {dimension_numbers = #tpu.dot_dimension_numbers<[1], [0], [0], [1], [0, 0, 1, 1], [], []>} : vector<2x128xbf16>, vector<128x128xbf16>, vector<2x128xf32> -> vector<2x128xf32>
    %c0_9 = arith.constant 0 : index
    %c0_10 = arith.constant 0 : index
    %12 = vector.load %arg5[%c0_9, %c0_10] : memref<1x128xf32, #tpu.memory_space<vmem>>, vector<1x128xf32>
    %13 = vector.broadcast %12 : vector<1x128xf32> to vector<2x128xf32>
    %14 = arith.addf %11, %13 : vector<2x128xf32>
    %cst_11 = arith.constant 0.000000e+00 : f32
    %15 = vector.broadcast %cst_11 : f32 to vector<2x128xf32>
    %16 = arith.maximumf %14, %15 : vector<2x128xf32>
    %17 = arith.truncf %16 : vector<2x128xf32> to vector<2x128xbf16>
    %c0_12 = arith.constant 0 : index
    %c0_13 = arith.constant 0 : index
    %18 = vector.load %arg6[%c0_12, %c0_13] : memref<128x128xbf16, #tpu.memory_space<vmem>>, vector<128x128xbf16>
    %cst_14 = arith.constant dense<0.000000e+00> : vector<2x128xf32>
    %19 = tpu.matmul %17, %18, %cst_14 {dimension_numbers = #tpu.dot_dimension_numbers<[1], [0], [0], [1], [0, 0, 1, 1], [], []>} : vector<2x128xbf16>, vector<128x128xbf16>, vector<2x128xf32> -> vector<2x128xf32>
    %c0_15 = arith.constant 0 : index
    %c0_16 = arith.constant 0 : index
    %20 = vector.load %arg7[%c0_15, %c0_16] : memref<1x128xf32, #tpu.memory_space<vmem>>, vector<1x128xf32>
    %21 = vector.broadcast %20 : vector<1x128xf32> to vector<2x128xf32>
    %22 = arith.addf %19, %21 : vector<2x128xf32>
    %cst_17 = arith.constant 0.000000e+00 : f32
    %23 = vector.broadcast %cst_17 : f32 to vector<2x128xf32>
    %24 = arith.maximumf %22, %23 : vector<2x128xf32>
    %25 = arith.truncf %24 : vector<2x128xf32> to vector<2x128xbf16>
    %c0_18 = arith.constant 0 : index
    %c0_19 = arith.constant 0 : index
    %26 = vector.load %arg8[%c0_18, %c0_19] : memref<128x256xbf16, #tpu.memory_space<vmem>>, vector<128x256xbf16>
    %cst_20 = arith.constant dense<0.000000e+00> : vector<2x256xf32>
    %27 = tpu.matmul %25, %26, %cst_20 {dimension_numbers = #tpu.dot_dimension_numbers<[1], [0], [0], [1], [0, 0, 1, 1], [], []>} : vector<2x128xbf16>, vector<128x256xbf16>, vector<2x256xf32> -> vector<2x256xf32>
    %c0_21 = arith.constant 0 : index
    %c0_22 = arith.constant 0 : index
    %28 = vector.load %arg9[%c0_21, %c0_22] : memref<1x256xf32, #tpu.memory_space<vmem>>, vector<1x256xf32>
    %29 = vector.broadcast %28 : vector<1x256xf32> to vector<2x256xf32>
    %30 = arith.addf %27, %29 : vector<2x256xf32>
    %31 = arith.negf %30 : vector<2x256xf32>
    %32 = math.exp %31 : vector<2x256xf32>
    %cst_23 = arith.constant 1.000000e+00 : f32
    %33 = vector.broadcast %cst_23 : f32 to vector<2x256xf32>
    %34 = arith.addf %33, %32 : vector<2x256xf32>
    %35 = arith.divf %33, %34 : vector<2x256xf32>
    %c0_24 = arith.constant 0 : index
    %c0_25 = arith.constant 0 : index
    %36 = vector.load %arg10[%c0_24, %c0_25] : memref<2x256xf32, #tpu.memory_space<vmem>>, vector<2x256xf32>
    tpu.vector_store %arg10[%c0_24, %c0_25], %35 {strides = array<i32>} : memref<2x256xf32, #tpu.memory_space<vmem>>, vector<2x256xf32>,
    return
  }
  func.func @transform_0(%arg0: i32) -> (i32, i32) {
    %c0_i32 = arith.constant 0 : i32
    %c0_i32_0 = arith.constant 0 : i32
    return %arg0, %c0_i32 : i32, i32
  }
  func.func @transform_1(%arg0: i32) -> (i32, i32) {
    %c0_i32 = arith.constant 0 : i32
    %c0_i32_0 = arith.constant 0 : i32
    %c0_i32_1 = arith.constant 0 : i32
    return %c0_i32, %c0_i32_0 : i32, i32
  }
  func.func @transform_2(%arg0: i32) -> (i32, i32) {
    %c0_i32 = arith.constant 0 : i32
    %c0_i32_0 = arith.constant 0 : i32
    %c0_i32_1 = arith.constant 0 : i32
    return %c0_i32, %c0_i32_0 : i32, i32
  }
  func.func @transform_3(%arg0: i32) -> (i32, i32) {
    %c0_i32 = arith.constant 0 : i32
    %c0_i32_0 = arith.constant 0 : i32
    %c0_i32_1 = arith.constant 0 : i32
    return %c0_i32, %c0_i32_0 : i32, i32
  }
  func.func @transform_4(%arg0: i32) -> (i32, i32) {
    %c0_i32 = arith.constant 0 : i32
    %c0_i32_0 = arith.constant 0 : i32
    %c0_i32_1 = arith.constant 0 : i32
    return %c0_i32, %c0_i32_0 : i32, i32
  }
  func.func @transform_5(%arg0: i32) -> (i32, i32) {
    %c0_i32 = arith.constant 0 : i32
    %c0_i32_0 = arith.constant 0 : i32
    %c0_i32_1 = arith.constant 0 : i32
    return %c0_i32, %c0_i32_0 : i32, i32
  }
  func.func @transform_6(%arg0: i32) -> (i32, i32) {
    %c0_i32 = arith.constant 0 : i32
    %c0_i32_0 = arith.constant 0 : i32
    %c0_i32_1 = arith.constant 0 : i32
    return %c0_i32, %c0_i32_0 : i32, i32
  }
  func.func @transform_7(%arg0: i32) -> (i32, i32) {
    %c0_i32 = arith.constant 0 : i32
    %c0_i32_0 = arith.constant 0 : i32
    %c0_i32_1 = arith.constant 0 : i32
    return %c0_i32, %c0_i32_0 : i32, i32
  }
  func.func @transform_8(%arg0: i32) -> (i32, i32) {
    %c0_i32 = arith.constant 0 : i32
    %c0_i32_0 = arith.constant 0 : i32
    %c0_i32_1 = arith.constant 0 : i32
    return %c0_i32, %c0_i32_0 : i32, i32
  }
  func.func @transform_9(%arg0: i32) -> (i32, i32) {
    %c0_i32 = arith.constant 0 : i32
    %c0_i32_0 = arith.constant 0 : i32
    return %arg0, %c0_i32 : i32, i32
  }
}

</mosaic_0001>

<llo_original>
// kernel: tpu_custom_call.1
$region0: #{tpu_custom_call.1}
  #allocation0 [shape = 'u32[]', space=smem, size = 0x4, offset = 0x4, fixed_abs, tag = 'smem constant byte address 0x4 - core index']
  #allocation1 [shape = 'u32[144,128]{1,0:T(1,128)}', space=vmem, size = 0x12000, scoped, tag = 'internal scratch']
  %s0 = inlined_call_operand.hbm [shape: f32[2,512], index: 0, kind: input, shape index: {}]
  %s1 = inlined_call_operand.hbm [shape: bf16[512,128], index: 1, kind: input, shape index: {}]
  %s2 = inlined_call_operand.vmem [shape: f32[1,128], index: 2, kind: input, shape index: {}]
  %s3 = inlined_call_operand.hbm [shape: bf16[128,128], index: 3, kind: input, shape index: {}]
  %s4 = inlined_call_operand.vmem [shape: f32[1,128], index: 4, kind: input, shape index: {}]
  %s5 = inlined_call_operand.hbm [shape: bf16[128,128], index: 5, kind: input, shape index: {}]
  %s6 = inlined_call_operand.vmem [shape: f32[1,128], index: 6, kind: input, shape index: {}]
  %s7 = inlined_call_operand.hbm [shape: bf16[128,256], index: 7, kind: input, shape index: {}]
  %s8 = inlined_call_operand.vmem [shape: f32[1,256], index: 8, kind: input, shape index: {}]
  %s9 = inlined_call_operand.hbm [shape: f32[2,256], index: 9, kind: output, shape index: {}]
  %s10 = sld [smem:[#allocation0]]
  $region66: #{tpu_custom_call.1} parent=0
    _
  %s12 = ssub.s32 1, %s10
  %s13 = scalar_select 0, %s12, %s10
  $region1: #{tpu_custom_call.1} parent=0
    #allocation2 [shape = 'u8[4096]{0}', space=vmem, size = 0x1000, scoped, tag = 'input window, operand 0, single buffered']
    #allocation3 [shape = 's32[1]{0}', space=sflag, size = 0x4, scoped, tag = 'scoped memory for tpu_custom_call.1']
    #allocation4 [shape = 's32[1]{0}', space=sflag, size = 0x4, scoped, tag = 'scoped memory for tpu_custom_call.1']
    #allocation5 [shape = 'u8[131072]{0}', space=vmem, size = 0x20000, scoped, tag = 'input window, operand 1, single buffered']
    #allocation6 [shape = 's32[1]{0}', space=sflag, size = 0x4, scoped, tag = 'scoped memory for tpu_custom_call.1']
    #allocation7 [shape = 'u8[32768]{0}', space=vmem, size = 0x8000, scoped, tag = 'input window, operand 3, single buffered']
    #allocation8 [shape = 'u8[32768]{0}', space=vmem, size = 0x8000, scoped, tag = 'input window, operand 5, single buffered']
    #allocation9 [shape = 's32[1]{0}', space=sflag, size = 0x4, scoped, tag = 'scoped memory for tpu_custom_call.1']
    #allocation10 [shape = 'u8[65536]{0}', space=vmem, size = 0x10000, scoped, tag = 'input window, operand 7, single buffered']
    #allocation11 [shape = 'u8[2048]{0}', space=vmem, size = 0x800, scoped, tag = 'output window, operand 0, single buffered']
    %14 = vsyncpa [#allocation3], 0
    %15 = vsyncpa [#allocation6], 0
    %16 = vsyncpa [#allocation9], 0
    %17 = vsyncpa [#allocation4], 0
    // Predicated region
    $region2: #{tpu_custom_call.1} parent=1 // pred_check
      _
    $region3: #{tpu_custom_call.1} parent=1 // pred_check_branch
      %19 = sbr.rel (0) target = $region5
    $region4: #{tpu_custom_call.1} parent=1 // pred_region
      %s21 = ssub.s32 128, 128
      %22 = vsyncadd [#allocation3], %s21
      %s24 = sshll.u32 [#allocation2], 4
      %s25 = int_to_ptr.vmem [resolvable:$true] %s24
      %27 = dma.hbm_to_vmem [thread:$0]  %s0, 128, %s25, [#allocation3]
    $region5: #{tpu_custom_call.1} parent=1 // pred_fallthru
      _
    // Predicated region
    $region6: #{tpu_custom_call.1} parent=1 // pred_check
      _
    $region7: #{tpu_custom_call.1} parent=1 // pred_check_branch
      %29 = sbr.rel (0) target = $region9
    $region8: #{tpu_custom_call.1} parent=1 // pred_region
      %s31 = ssub.s32 4096, 4096
      %32 = vsyncadd [#allocation6], %s31
      %s33 = sshll.u32 [#allocation5], 4
      %s34 = int_to_ptr.vmem [resolvable:$true] %s33
      %39 = dma.hbm_to_vmem [thread:$0]  %s1, 4096, %s34, [#allocation6], 64, 64, 4
    $region9: #{tpu_custom_call.1} parent=1 // pred_fallthru
      _
    // Predicated region
    $region10: #{tpu_custom_call.1} parent=1 // pred_check
      _
    $region11: #{tpu_custom_call.1} parent=1 // pred_check_branch
      %41 = sbr.rel (0) target = $region13
    $region12: #{tpu_custom_call.1} parent=1 // pred_region
      _
    $region13: #{tpu_custom_call.1} parent=1 // pred_fallthru
      _
    // Predicated region
    $region14: #{tpu_custom_call.1} parent=1 // pred_check
      _
    $region15: #{tpu_custom_call.1} parent=1 // pred_check_branch
      %43 = sbr.rel (0) target = $region17
    $region16: #{tpu_custom_call.1} parent=1 // pred_region
      %s45 = ssub.s32 1024, 1024
      %46 = vsyncadd [#allocation6], %s45
      %s47 = sshll.u32 [#allocation7], 4
      %s48 = int_to_ptr.vmem [resolvable:$true] %s47
      %53 = dma.hbm_to_vmem [thread:$0]  %s3, 1024, %s48, [#allocation6], 64, 64, 4
    $region17: #{tpu_custom_call.1} parent=1 // pred_fallthru
      _
    // Predicated region
    $region18: #{tpu_custom_call.1} parent=1 // pred_check
      _
    $region19: #{tpu_custom_call.1} parent=1 // pred_check_branch
      %55 = sbr.rel (0) target = $region21
    $region20: #{tpu_custom_call.1} parent=1 // pred_region
      _
    $region21: #{tpu_custom_call.1} parent=1 // pred_fallthru
      _
    // Predicated region
    $region22: #{tpu_custom_call.1} parent=1 // pred_check
      _
    $region23: #{tpu_custom_call.1} parent=1 // pred_check_branch
      %57 = sbr.rel (0) target = $region25
    $region24: #{tpu_custom_call.1} parent=1 // pred_region
      %s59 = ssub.s32 1024, 1024
      %60 = vsyncadd [#allocation9], %s59
      %s61 = sshll.u32 [#allocation8], 4
      %s62 = int_to_ptr.vmem [resolvable:$true] %s61
      %67 = dma.hbm_to_vmem [thread:$0]  %s5, 1024, %s62, [#allocation9], 64, 64, 4
    $region25: #{tpu_custom_call.1} parent=1 // pred_fallthru
      _
    // Predicated region
    $region26: #{tpu_custom_call.1} parent=1 // pred_check
      _
    $region27: #{tpu_custom_call.1} parent=1 // pred_check_branch
      %69 = sbr.rel (0) target = $region29
    $region28: #{tpu_custom_call.1} parent=1 // pred_region
      _
    $region29: #{tpu_custom_call.1} parent=1 // pred_fallthru
      _
    // Predicated region
    $region30: #{tpu_custom_call.1} parent=1 // pred_check
      _
    $region31: #{tpu_custom_call.1} parent=1 // pred_check_branch
      %71 = sbr.rel (0) target = $region33
    $region32: #{tpu_custom_call.1} parent=1 // pred_region
      %s73 = ssub.s32 2048, 2048
      %74 = vsyncadd [#allocation9], %s73
      %s75 = sshll.u32 [#allocation10], 4
      %s76 = int_to_ptr.vmem [resolvable:$true] %s75
      %81 = dma.hbm_to_vmem [thread:$0]  %s7, 2048, %s76, [#allocation9], 128, 128, 8
    $region33: #{tpu_custom_call.1} parent=1 // pred_fallthru
      _
    // Predicated region
    $region34: #{tpu_custom_call.1} parent=1 // pred_check
      _
    $region35: #{tpu_custom_call.1} parent=1 // pred_check_branch
      %83 = sbr.rel (0) target = $region37
    $region36: #{tpu_custom_call.1} parent=1 // pred_region
      _
    $region37: #{tpu_custom_call.1} parent=1 // pred_fallthru
      _
    // Predicated region
    $region38: #{tpu_custom_call.1} parent=1 // pred_check
      _
    $region39: #{tpu_custom_call.1} parent=1 // pred_check_branch
      %85 = sbr.rel (0) target = $region41
    $region40: #{tpu_custom_call.1} parent=1 // pred_region
      %86 = dma.done [#allocation3], 128
    $region41: #{tpu_custom_call.1} parent=1 // pred_fallthru
      _
    // Predicated region
    $region42: #{tpu_custom_call.1} parent=1 // pred_check
      _
    $region43: #{tpu_custom_call.1} parent=1 // pred_check_branch
      %88 = sbr.rel (0) target = $region45
    $region44: #{tpu_custom_call.1} parent=1 // pred_region
      %89 = dma.done [#allocation6], 4096
    $region45: #{tpu_custom_call.1} parent=1 // pred_fallthru
      _
    // Predicated region
    $region46: #{tpu_custom_call.1} parent=1 // pred_check
      _
    $region47: #{tpu_custom_call.1} parent=1 // pred_check_branch
      %91 = sbr.rel (0) target = $region49
    $region48: #{tpu_custom_call.1} parent=1 // pred_region
      %92 = dma.done [#allocation6], 1024
    $region49: #{tpu_custom_call.1} parent=1 // pred_fallthru
      _
    // Predicated region
    $region50: #{tpu_custom_call.1} parent=1 // pred_check
      _
    $region51: #{tpu_custom_call.1} parent=1 // pred_check_branch
      %94 = sbr.rel (0) target = $region53
    $region52: #{tpu_custom_call.1} parent=1 // pred_region
      %95 = dma.done [#allocation9], 1024
    $region53: #{tpu_custom_call.1} parent=1 // pred_fallthru
      _
    // Predicated region
    $region54: #{tpu_custom_call.1} parent=1 // pred_check
      _
    $region55: #{tpu_custom_call.1} parent=1 // pred_check_branch
      %97 = sbr.rel (0) target = $region57
    $region56: #{tpu_custom_call.1} parent=1 // pred_region
      %98 = dma.done [#allocation9], 2048
    $region57: #{tpu_custom_call.1} parent=1 // pred_fallthru
      _
    %v100 = vld [vmem:[#allocation2] sm:$0xff]
    %v102 = vcombine.high %v100, %v100
    %v104 = vunpack.c.l.s4 1983009808
    %v105 = vunpack.c.0.s8 %v104
    %v106 = vlaneseq
    %v107 = vshrl.u32 %v106, 7
    %v108 = vsub.s32 %v105, %v107
    %v109 = vrot.slane %v100, %v108
    %v111 = vunpack.c.l.s4 1983009808
    %v112 = vunpack.c.0.s8 %v111
    %v113 = vlaneseq
    %v114 = vshrl.u32 %v113, 7
    %v115 = vsub.s32 %v112, %v114
    %v116 = vrot.slane %v102, %v115
    %v117 = vcombine.high %v109, %v109
    %v118 = vcombine.high %v116, %v116
    %v123 = vpack.c.bf16 %v109, %v109
    %v124 = vpack.c.bf16 %v117, %v117
    %v125 = vpack.c.bf16 %v116, %v116
    %v126 = vpack.c.bf16 %v118, %v118
    %v127 = vld [vmem:[#allocation5] sm:$0xf]
    %v128 = vld [vmem:[#allocation5 + $0x4] sm:$0xf]
    %v129 = vld [vmem:[#allocation5 + $0x8] sm:$0xf]
    %v130 = vld [vmem:[#allocation5 + $0xc] sm:$0xf]
    %v131 = vld [vmem:[#allocation5 + $0x10] sm:$0xf]
    %v132 = vld [vmem:[#allocation5 + $0x14] sm:$0xf]
    %v133 = vld [vmem:[#allocation5 + $0x18] sm:$0xf]
    %v134 = vld [vmem:[#allocation5 + $0x1c] sm:$0xf]
    %v135 = vld [vmem:[#allocation5 + $0x20] sm:$0xf]
    %v136 = vld [vmem:[#allocation5 + $0x24] sm:$0xf]
    %v137 = vld [vmem:[#allocation5 + $0x28] sm:$0xf]
    %v138 = vld [vmem:[#allocation5 + $0x2c] sm:$0xf]
    %v139 = vld [vmem:[#allocation5 + $0x30] sm:$0xf]
    %v140 = vld [vmem:[#allocation5 + $0x34] sm:$0xf]
    %v141 = vld [vmem:[#allocation5 + $0x38] sm:$0xf]
    %v142 = vld [vmem:[#allocation5 + $0x3c] sm:$0xf]
    %v143 = vld [vmem:[#allocation5 + $0x40] sm:$0xf]
    %v144 = vld [vmem:[#allocation5 + $0x44] sm:$0xf]
    %v145 = vld [vmem:[#allocation5 + $0x48] sm:$0xf]
    %v146 = vld [vmem:[#allocation5 + $0x4c] sm:$0xf]
    %v147 = vld [vmem:[#allocation5 + $0x50] sm:$0xf]
    %v148 = vld [vmem:[#allocation5 + $0x54] sm:$0xf]
    %v149 = vld [vmem:[#allocation5 + $0x58] sm:$0xf]
    %v150 = vld [vmem:[#allocation5 + $0x5c] sm:$0xf]
    %v151 = vld [vmem:[#allocation5 + $0x60] sm:$0xf]
    %v152 = vld [vmem:[#allocation5 + $0x64] sm:$0xf]
    %v153 = vld [vmem:[#allocation5 + $0x68] sm:$0xf]
    %v154 = vld [vmem:[#allocation5 + $0x6c] sm:$0xf]
    %v155 = vld [vmem:[#allocation5 + $0x70] sm:$0xf]
    %v156 = vld [vmem:[#allocation5 + $0x74] sm:$0xf]
    %v157 = vld [vmem:[#allocation5 + $0x78] sm:$0xf]
    %v158 = vld [vmem:[#allocation5 + $0x7c] sm:$0xf]
    %v159 = vld [vmem:[#allocation5 + $0x80] sm:$0xf]
    %v160 = vld [vmem:[#allocation5 + $0x84] sm:$0xf]
    %v161 = vld [vmem:[#allocation5 + $0x88] sm:$0xf]
    %v162 = vld [vmem:[#allocation5 + $0x8c] sm:$0xf]
    %v163 = vld [vmem:[#allocation5 + $0x90] sm:$0xf]
    %v164 = vld [vmem:[#allocation5 + $0x94] sm:$0xf]
    %v165 = vld [vmem:[#allocation5 + $0x98] sm:$0xf]
    %v166 = vld [vmem:[#allocation5 + $0x9c] sm:$0xf]
    %v167 = vld [vmem:[#allocation5 + $0xa0] sm:$0xf]
    %v168 = vld [vmem:[#allocation5 + $0xa4] sm:$0xf]
    %v169 = vld [vmem:[#allocation5 + $0xa8] sm:$0xf]
    %v170 = vld [vmem:[#allocation5 + $0xac] sm:$0xf]
    %v171 = vld [vmem:[#allocation5 + $0xb0] sm:$0xf]
    %v172 = vld [vmem:[#allocation5 + $0xb4] sm:$0xf]
    %v173 = vld [vmem:[#allocation5 + $0xb8] sm:$0xf]
    %v174 = vld [vmem:[#allocation5 + $0xbc] sm:$0xf]
    %v175 = vld [vmem:[#allocation5 + $0xc0] sm:$0xf]
    %v176 = vld [vmem:[#allocation5 + $0xc4] sm:$0xf]
    %v177 = vld [vmem:[#allocation5 + $0xc8] sm:$0xf]
    %v178 = vld [vmem:[#allocation5 + $0xcc] sm:$0xf]
    %v179 = vld [vmem:[#allocation5 + $0xd0] sm:$0xf]
    %v180 = vld [vmem:[#allocation5 + $0xd4] sm:$0xf]
    %v181 = vld [vmem:[#allocation5 + $0xd8] sm:$0xf]
    %v182 = vld [vmem:[#allocation5 + $0xdc] sm:$0xf]
    %v183 = vld [vmem:[#allocation5 + $0xe0] sm:$0xf]
    %v184 = vld [vmem:[#allocation5 + $0xe4] sm:$0xf]
    %v185 = vld [vmem:[#allocation5 + $0xe8] sm:$0xf]
    %v186 = vld [vmem:[#allocation5 + $0xec] sm:$0xf]
    %v187 = vld [vmem:[#allocation5 + $0xf0] sm:$0xf]
    %v188 = vld [vmem:[#allocation5 + $0xf4] sm:$0xf]
    %v189 = vld [vmem:[#allocation5 + $0xf8] sm:$0xf]
    %v190 = vld [vmem:[#allocation5 + $0xfc] sm:$0xf]
    %v191 = vld [vmem:[%s2] sm:$0x1]
    %v193 = vlaneseq
    %v194 = vshrl.u32 %v193, 7
    %v195 = vsub.s32 0, %v194
    %v196 = vrot.slane %v191, %v195
    %v262 = vunpack.c.l.b16 %v127
    %v263 = vunpack.c.l.b16 %v128
    %v264 = vunpack.c.l.b16 %v129
    %v265 = vunpack.c.l.b16 %v130
    %v266 = vunpack.c.l.b16 %v131
    %v267 = vunpack.c.l.b16 %v132
    %v268 = vunpack.c.l.b16 %v133
    %v269 = vunpack.c.l.b16 %v134
    %v270 = vunpack.c.l.b16 %v135
    %v271 = vunpack.c.l.b16 %v136
    %v272 = vunpack.c.l.b16 %v137
    %v273 = vunpack.c.l.b16 %v138
    %v274 = vunpack.c.l.b16 %v139
    %v275 = vunpack.c.l.b16 %v140
    %v276 = vunpack.c.l.b16 %v141
    %v277 = vunpack.c.l.b16 %v142
    %v278 = vunpack.c.l.b16 %v143
    %v279 = vunpack.c.l.b16 %v144
    %v280 = vunpack.c.l.b16 %v145
    %v281 = vunpack.c.l.b16 %v146
    %v282 = vunpack.c.l.b16 %v147
    %v283 = vunpack.c.l.b16 %v148
    %v284 = vunpack.c.l.b16 %v149
    %v285 = vunpack.c.l.b16 %v150
    %v286 = vunpack.c.l.b16 %v151
    %v287 = vunpack.c.l.b16 %v152
    %v288 = vunpack.c.l.b16 %v153
    %v289 = vunpack.c.l.b16 %v154
    %v290 = vunpack.c.l.b16 %v155
    %v291 = vunpack.c.l.b16 %v156
    %v292 = vunpack.c.l.b16 %v157
    %v293 = vunpack.c.l.b16 %v158
    %v294 = vunpack.c.l.b16 %v159
    %v295 = vunpack.c.l.b16 %v160
    %v296 = vunpack.c.l.b16 %v161
    %v297 = vunpack.c.l.b16 %v162
    %v298 = vunpack.c.l.b16 %v163
    %v299 = vunpack.c.l.b16 %v164
    %v300 = vunpack.c.l.b16 %v165
    %v301 = vunpack.c.l.b16 %v166
    %v302 = vunpack.c.l.b16 %v167
    %v303 = vunpack.c.l.b16 %v168
    %v304 = vunpack.c.l.b16 %v169
    %v305 = vunpack.c.l.b16 %v170
    %v306 = vunpack.c.l.b16 %v171
    %v307 = vunpack.c.l.b16 %v172
    %v308 = vunpack.c.l.b16 %v173
    %v309 = vunpack.c.l.b16 %v174
    %v310 = vunpack.c.l.b16 %v175
    %v311 = vunpack.c.l.b16 %v176
    %v312 = vunpack.c.l.b16 %v177
    %v313 = vunpack.c.l.b16 %v178
    %v314 = vunpack.c.l.b16 %v179
    %v315 = vunpack.c.l.b16 %v180
    %v316 = vunpack.c.l.b16 %v181
    %v317 = vunpack.c.l.b16 %v182
    %v318 = vunpack.c.l.b16 %v183
    %v319 = vunpack.c.l.b16 %v184
    %v320 = vunpack.c.l.b16 %v185
    %v321 = vunpack.c.l.b16 %v186
    %v322 = vunpack.c.l.b16 %v187
    %v323 = vunpack.c.l.b16 %v188
    %v324 = vunpack.c.l.b16 %v189
    %v325 = vunpack.c.l.b16 %v190
    %v326 = vpack.c.b16 %v263, %v262
    %v327 = vpack.c.b16 %v265, %v264
    %v328 = vpack.c.b16 %v267, %v266
    %v329 = vpack.c.b16 %v269, %v268
    %v330 = vpack.c.b16 %v271, %v270
    %v331 = vpack.c.b16 %v273, %v272
    %v332 = vpack.c.b16 %v275, %v274
    %v333 = vpack.c.b16 %v277, %v276
    %v334 = vpack.c.b16 %v279, %v278
    %v335 = vpack.c.b16 %v281, %v280
    %v336 = vpack.c.b16 %v283, %v282
    %v337 = vpack.c.b16 %v285, %v284
    %v338 = vpack.c.b16 %v287, %v286
    %v339 = vpack.c.b16 %v289, %v288
    %v340 = vpack.c.b16 %v291, %v290
    %v341 = vpack.c.b16 %v293, %v292
    %v342 = vpack.c.b16 %v295, %v294
    %v343 = vpack.c.b16 %v297, %v296
    %v344 = vpack.c.b16 %v299, %v298
    %v345 = vpack.c.b16 %v301, %v300
    %v346 = vpack.c.b16 %v303, %v302
    %v347 = vpack.c.b16 %v305, %v304
    %v348 = vpack.c.b16 %v307, %v306
    %v349 = vpack.c.b16 %v309, %v308
    %v350 = vpack.c.b16 %v311, %v310
    %v351 = vpack.c.b16 %v313, %v312
    %v352 = vpack.c.b16 %v315, %v314
    %v353 = vpack.c.b16 %v317, %v316
    %v354 = vpack.c.b16 %v319, %v318
    %v355 = vpack.c.b16 %v321, %v320
    %v356 = vpack.c.b16 %v323, %v322
    %v357 = vpack.c.b16 %v325, %v324
    %390 = vmatprep.subr.bf16.mxu0 0
    %391 = vmatpush1.bf16.msra.mxu0 %v333
    %392 = vmatprep.subr.bf16.mxu0 0
    %393 = vmatpush1.bf16.msra.mxu0 %v332
    %394 = vmatprep.subr.bf16.mxu0 0
    %395 = vmatpush1.bf16.msra.mxu0 %v331
    %396 = vmatprep.subr.bf16.mxu0 0
    %397 = vmatpush1.bf16.msra.mxu0 %v330
    %398 = vmatprep.subr.bf16.mxu0 0
    %399 = vmatpush1.bf16.msra.mxu0 %v329
    %400 = vmatprep.subr.bf16.mxu0 0
    %401 = vmatpush1.bf16.msra.mxu0 %v328
    %402 = vmatprep.subr.bf16.mxu0 0
    %403 = vmatpush1.bf16.msra.mxu0 %v327
    %404 = vmatprep.subr.bf16.mxu0 0
    %405 = vmatpush1.bf16.msra.mxu0 %v326
    %406 = vmatprep.subr.bf16.mxu0 0
    %407 = vmatpush2.bf16.msra.mxu0 %v341
    %408 = vmatprep.subr.bf16.mxu0 0
    %409 = vmatpush2.bf16.msra.mxu0 %v340
    %410 = vmatprep.subr.bf16.mxu0 0
    %411 = vmatpush2.bf16.msra.mxu0 %v339
    %412 = vmatprep.subr.bf16.mxu0 0
    %413 = vmatpush2.bf16.msra.mxu0 %v338
    %414 = vmatprep.subr.bf16.mxu0 0
    %415 = vmatpush2.bf16.msra.mxu0 %v337
    %416 = vmatprep.subr.bf16.mxu0 0
    %417 = vmatpush2.bf16.msra.mxu0 %v336
    %418 = vmatprep.subr.bf16.mxu0 0
    %419 = vmatpush2.bf16.msra.mxu0 %v335
    %420 = vmatprep.subr.bf16.mxu0 0
    %421 = vmatpush2.bf16.msra.mxu0 %v334
    %422 = vmatprep.mubr.bf16.mxu0 %v124
    %423 = vmatmul.mubr.bf16.gmra.mxu0 %v123
    %v424 = vpop.f32.mrf.mxu0
    %v425 = vadd.f32 %v196, %v424
    %v426 = vpop.f32.mrf.mxu0
    %v427 = vpop.f32.mrf.mxu0
    %v428 = vpop.f32.mrf.mxu0
    %429 = vdwg.mxu0
    %430 = vmatprep.subr.bf16.mxu0 0
    %431 = vmatpush1.bf16.msra.mxu0 %v349
    %432 = vmatprep.subr.bf16.mxu0 0
    %433 = vmatpush1.bf16.msra.mxu0 %v348
    %434 = vmatprep.subr.bf16.mxu0 0
    %435 = vmatpush1.bf16.msra.mxu0 %v347
    %436 = vmatprep.subr.bf16.mxu0 0
    %437 = vmatpush1.bf16.msra.mxu0 %v346
    %438 = vmatprep.subr.bf16.mxu0 0
    %439 = vmatpush1.bf16.msra.mxu0 %v345
    %440 = vmatprep.subr.bf16.mxu0 0
    %441 = vmatpush1.bf16.msra.mxu0 %v344
    %442 = vmatprep.subr.bf16.mxu0 0
    %443 = vmatpush1.bf16.msra.mxu0 %v343
    %444 = vmatprep.subr.bf16.mxu0 0
    %445 = vmatpush1.bf16.msra.mxu0 %v342
    %446 = vmatprep.subr.bf16.mxu0 0
    %447 = vmatpush2.bf16.msra.mxu0 %v357
    %448 = vmatprep.subr.bf16.mxu0 0
    %449 = vmatpush2.bf16.msra.mxu0 %v356
    %450 = vmatprep.subr.bf16.mxu0 0
    %451 = vmatpush2.bf16.msra.mxu0 %v355
    %452 = vmatprep.subr.bf16.mxu0 0
    %453 = vmatpush2.bf16.msra.mxu0 %v354
    %454 = vmatprep.subr.bf16.mxu0 0
    %455 = vmatpush2.bf16.msra.mxu0 %v353
    %456 = vmatprep.subr.bf16.mxu0 0
    %457 = vmatpush2.bf16.msra.mxu0 %v352
    %458 = vmatprep.subr.bf16.mxu0 0
    %459 = vmatpush2.bf16.msra.mxu0 %v351
    %460 = vmatprep.subr.bf16.mxu0 0
    %461 = vmatpush2.bf16.msra.mxu0 %v350
    %462 = vmatprep.mubr.bf16.mxu0 %v126
    %463 = vmatmul.mubr.bf16.gmra.mxu0 %v125
    %v464 = vpop.f32.mrf.mxu0
    %v465 = vadd.f32 %v425, %v464
    %v466 = vpop.f32.mrf.mxu0
    %v467 = vpop.f32.mrf.mxu0
    %v468 = vpop.f32.mrf.mxu0
    %469 = vdwg.mxu0
    %v470 = vmax.f32 %v465, 0.0
    %v471 = vpack.c.bf16 %v470, %v470
    %v472 = vld [vmem:[#allocation7] sm:$0xf]
    %v473 = vld [vmem:[#allocation7 + $0x4] sm:$0xf]
    %v474 = vld [vmem:[#allocation7 + $0x8] sm:$0xf]
    %v475 = vld [vmem:[#allocation7 + $0xc] sm:$0xf]
    %v476 = vld [vmem:[#allocation7 + $0x10] sm:$0xf]
    %v477 = vld [vmem:[#allocation7 + $0x14] sm:$0xf]
    %v478 = vld [vmem:[#allocation7 + $0x18] sm:$0xf]
    %v479 = vld [vmem:[#allocation7 + $0x1c] sm:$0xf]
    %v480 = vld [vmem:[#allocation7 + $0x20] sm:$0xf]
    %v481 = vld [vmem:[#allocation7 + $0x24] sm:$0xf]
    %v482 = vld [vmem:[#allocation7 + $0x28] sm:$0xf]
    %v483 = vld [vmem:[#allocation7 + $0x2c] sm:$0xf]
    %v484 = vld [vmem:[#allocation7 + $0x30] sm:$0xf]
    %v485 = vld [vmem:[#allocation7 + $0x34] sm:$0xf]
    %v486 = vld [vmem:[#allocation7 + $0x38] sm:$0xf]
    %v487 = vld [vmem:[#allocation7 + $0x3c] sm:$0xf]
    %v488 = vld [vmem:[%s4] sm:$0x1]
    %v490 = vlaneseq
    %v491 = vshrl.u32 %v490, 7
    %v492 = vsub.s32 0, %v491
    %v493 = vrot.slane %v488, %v492
    %v511 = vunpack.c.l.b16 %v472
    %v512 = vunpack.c.l.b16 %v473
    %v513 = vunpack.c.l.b16 %v474
    %v514 = vunpack.c.l.b16 %v475
    %v515 = vunpack.c.l.b16 %v476
    %v516 = vunpack.c.l.b16 %v477
    %v517 = vunpack.c.l.b16 %v478
    %v518 = vunpack.c.l.b16 %v479
    %v519 = vunpack.c.l.b16 %v480
    %v520 = vunpack.c.l.b16 %v481
    %v521 = vunpack.c.l.b16 %v482
    %v522 = vunpack.c.l.b16 %v483
    %v523 = vunpack.c.l.b16 %v484
    %v524 = vunpack.c.l.b16 %v485
    %v525 = vunpack.c.l.b16 %v486
    %v526 = vunpack.c.l.b16 %v487
    %v527 = vpack.c.b16 %v512, %v511
    %v528 = vpack.c.b16 %v514, %v513
    %v529 = vpack.c.b16 %v516, %v515
    %v530 = vpack.c.b16 %v518, %v517
    %v531 = vpack.c.b16 %v520, %v519
    %v532 = vpack.c.b16 %v522, %v521
    %v533 = vpack.c.b16 %v524, %v523
    %v534 = vpack.c.b16 %v526, %v525
    %543 = vmatprep.subr.bf16.mxu0 0
    %544 = vmatpush1.bf16.msra.mxu0 %v534
    %545 = vmatprep.subr.bf16.mxu0 0
    %546 = vmatpush1.bf16.msra.mxu0 %v533
    %547 = vmatprep.subr.bf16.mxu0 0
    %548 = vmatpush1.bf16.msra.mxu0 %v532
    %549 = vmatprep.subr.bf16.mxu0 0
    %550 = vmatpush1.bf16.msra.mxu0 %v531
    %551 = vmatprep.subr.bf16.mxu0 0
    %552 = vmatpush1.bf16.msra.mxu0 %v530
    %553 = vmatprep.subr.bf16.mxu0 0
    %554 = vmatpush1.bf16.msra.mxu0 %v529
    %555 = vmatprep.subr.bf16.mxu0 0
    %556 = vmatpush1.bf16.msra.mxu0 %v528
    %557 = vmatprep.subr.bf16.mxu0 0
    %558 = vmatpush1.bf16.msra.mxu0 %v527
    %559 = vmatprep.subr.bf16.mxu0 0
    %560 = vmatpush2.bf16.msra.mxu0 0
    %561 = vmatprep.subr.bf16.mxu0 0
    %562 = vmatpush2.bf16.msra.mxu0 0
    %563 = vmatprep.subr.bf16.mxu0 0
    %564 = vmatpush2.bf16.msra.mxu0 0
    %565 = vmatprep.subr.bf16.mxu0 0
    %566 = vmatpush2.bf16.msra.mxu0 0
    %567 = vmatprep.subr.bf16.mxu0 0
    %568 = vmatpush2.bf16.msra.mxu0 0
    %569 = vmatprep.subr.bf16.mxu0 0
    %570 = vmatpush2.bf16.msra.mxu0 0
    %571 = vmatprep.subr.bf16.mxu0 0
    %572 = vmatpush2.bf16.msra.mxu0 0
    %573 = vmatprep.subr.bf16.mxu0 0
    %574 = vmatpush2.bf16.msra.mxu0 0
    %575 = vmatprep.mubr.bf16.mxu0 0
    %576 = vmatmul.mubr.bf16.gmra.mxu0 %v471
    %v577 = vpop.f32.mrf.mxu0
    %v578 = vadd.f32 %v493, %v577
    %v579 = vpop.f32.mrf.mxu0
    %v580 = vpop.f32.mrf.mxu0
    %v581 = vpop.f32.mrf.mxu0
    %582 = vdwg.mxu0
    %v583 = vmax.f32 %v578, 0.0
    %v584 = vpack.c.bf16 %v583, %v583
    %v585 = vld [vmem:[#allocation8] sm:$0xf]
    %v586 = vld [vmem:[#allocation8 + $0x4] sm:$0xf]
    %v587 = vld [vmem:[#allocation8 + $0x8] sm:$0xf]
    %v588 = vld [vmem:[#allocation8 + $0xc] sm:$0xf]
    %v589 = vld [vmem:[#allocation8 + $0x10] sm:$0xf]
    %v590 = vld [vmem:[#allocation8 + $0x14] sm:$0xf]
    %v591 = vld [vmem:[#allocation8 + $0x18] sm:$0xf]
    %v592 = vld [vmem:[#allocation8 + $0x1c] sm:$0xf]
    %v593 = vld [vmem:[#allocation8 + $0x20] sm:$0xf]
    %v594 = vld [vmem:[#allocation8 + $0x24] sm:$0xf]
    %v595 = vld [vmem:[#allocation8 + $0x28] sm:$0xf]
    %v596 = vld [vmem:[#allocation8 + $0x2c] sm:$0xf]
    %v597 = vld [vmem:[#allocation8 + $0x30] sm:$0xf]
    %v598 = vld [vmem:[#allocation8 + $0x34] sm:$0xf]
    %v599 = vld [vmem:[#allocation8 + $0x38] sm:$0xf]
    %v600 = vld [vmem:[#allocation8 + $0x3c] sm:$0xf]
    %v601 = vld [vmem:[%s6] sm:$0x1]
    %v603 = vlaneseq
    %v604 = vshrl.u32 %v603, 7
    %v605 = vsub.s32 0, %v604
    %v606 = vrot.slane %v601, %v605
    %v624 = vunpack.c.l.b16 %v585
    %v625 = vunpack.c.l.b16 %v586
    %v626 = vunpack.c.l.b16 %v587
    %v627 = vunpack.c.l.b16 %v588
    %v628 = vunpack.c.l.b16 %v589
    %v629 = vunpack.c.l.b16 %v590
    %v630 = vunpack.c.l.b16 %v591
    %v631 = vunpack.c.l.b16 %v592
    %v632 = vunpack.c.l.b16 %v593
    %v633 = vunpack.c.l.b16 %v594
    %v634 = vunpack.c.l.b16 %v595
    %v635 = vunpack.c.l.b16 %v596
    %v636 = vunpack.c.l.b16 %v597
    %v637 = vunpack.c.l.b16 %v598
    %v638 = vunpack.c.l.b16 %v599
    %v639 = vunpack.c.l.b16 %v600
    %v640 = vpack.c.b16 %v625, %v624
    %v641 = vpack.c.b16 %v627, %v626
    %v642 = vpack.c.b16 %v629, %v628
    %v643 = vpack.c.b16 %v631, %v630
    %v644 = vpack.c.b16 %v633, %v632
    %v645 = vpack.c.b16 %v635, %v634
    %v646 = vpack.c.b16 %v637, %v636
    %v647 = vpack.c.b16 %v639, %v638
    %656 = vmatprep.subr.bf16.mxu0 0
    %657 = vmatpush1.bf16.msra.mxu0 %v647
    %658 = vmatprep.subr.bf16.mxu0 0
    %659 = vmatpush1.bf16.msra.mxu0 %v646
    %660 = vmatprep.subr.bf16.mxu0 0
    %661 = vmatpush1.bf16.msra.mxu0 %v645
    %662 = vmatprep.subr.bf16.mxu0 0
    %663 = vmatpush1.bf16.msra.mxu0 %v644
    %664 = vmatprep.subr.bf16.mxu0 0
    %665 = vmatpush1.bf16.msra.mxu0 %v643
    %666 = vmatprep.subr.bf16.mxu0 0
    %667 = vmatpush1.bf16.msra.mxu0 %v642
    %668 = vmatprep.subr.bf16.mxu0 0
    %669 = vmatpush1.bf16.msra.mxu0 %v641
    %670 = vmatprep.subr.bf16.mxu0 0
    %671 = vmatpush1.bf16.msra.mxu0 %v640
    %672 = vmatprep.subr.bf16.mxu0 0
    %673 = vmatpush2.bf16.msra.mxu0 0
    %674 = vmatprep.subr.bf16.mxu0 0
    %675 = vmatpush2.bf16.msra.mxu0 0
    %676 = vmatprep.subr.bf16.mxu0 0
    %677 = vmatpush2.bf16.msra.mxu0 0
    %678 = vmatprep.subr.bf16.mxu0 0
    %679 = vmatpush2.bf16.msra.mxu0 0
    %680 = vmatprep.subr.bf16.mxu0 0
    %681 = vmatpush2.bf16.msra.mxu0 0
    %682 = vmatprep.subr.bf16.mxu0 0
    %683 = vmatpush2.bf16.msra.mxu0 0
    %684 = vmatprep.subr.bf16.mxu0 0
    %685 = vmatpush2.bf16.msra.mxu0 0
    %686 = vmatprep.subr.bf16.mxu0 0
    %687 = vmatpush2.bf16.msra.mxu0 0
    %688 = vmatprep.mubr.bf16.mxu0 0
    %689 = vmatmul.mubr.bf16.gmra.mxu0 %v584
    %v690 = vpop.f32.mrf.mxu0
    %v691 = vadd.f32 %v606, %v690
    %v692 = vpop.f32.mrf.mxu0
    %v693 = vpop.f32.mrf.mxu0
    %v694 = vpop.f32.mrf.mxu0
    %695 = vdwg.mxu0
    %v696 = vmax.f32 %v691, 0.0
    %v697 = vpack.c.bf16 %v696, %v696
    %v698 = vld [vmem:[#allocation10] sm:$0xff]
    %v699 = vld [vmem:[#allocation10 + $0x8] sm:$0xff]
    %v700 = vld [vmem:[#allocation10 + $0x10] sm:$0xff]
    %v701 = vld [vmem:[#allocation10 + $0x18] sm:$0xff]
    %v702 = vld [vmem:[#allocation10 + $0x20] sm:$0xff]
    %v703 = vld [vmem:[#allocation10 + $0x28] sm:$0xff]
    %v704 = vld [vmem:[#allocation10 + $0x30] sm:$0xff]
    %v705 = vld [vmem:[#allocation10 + $0x38] sm:$0xff]
    %v706 = vld [vmem:[#allocation10 + $0x40] sm:$0xff]
    %v707 = vld [vmem:[#allocation10 + $0x48] sm:$0xff]
    %v708 = vld [vmem:[#allocation10 + $0x50] sm:$0xff]
    %v709 = vld [vmem:[#allocation10 + $0x58] sm:$0xff]
    %v710 = vld [vmem:[#allocation10 + $0x60] sm:$0xff]
    %v711 = vld [vmem:[#allocation10 + $0x68] sm:$0xff]
    %v712 = vld [vmem:[#allocation10 + $0x70] sm:$0xff]
    %v713 = vld [vmem:[#allocation10 + $0x78] sm:$0xff]
    %v714 = vld [vmem:[%s8] sm:$0x3]
    %v716 = vlaneseq
    %v717 = vshrl.u32 %v716, 7
    %v718 = vsub.s32 0, %v717
    %v719 = vrot.slane %v714, %v718
    %v720 = vlaneseq
    %v721 = vshrl.u32 %v720, 7
    %v722 = vsub.s32 1, %v721
    %v723 = vrot.slane %v714, %v722
    %v742 = vunpack.c.l.b16 %v698
    %v743 = vunpack.c.h.b16 %v698
    %v744 = vunpack.c.l.b16 %v699
    %v745 = vunpack.c.h.b16 %v699
    %v746 = vunpack.c.l.b16 %v700
    %v747 = vunpack.c.h.b16 %v700
    %v748 = vunpack.c.l.b16 %v701
    %v749 = vunpack.c.h.b16 %v701
    %v750 = vunpack.c.l.b16 %v702
    %v751 = vunpack.c.h.b16 %v702
    %v752 = vunpack.c.l.b16 %v703
    %v753 = vunpack.c.h.b16 %v703
    %v754 = vunpack.c.l.b16 %v704
    %v755 = vunpack.c.h.b16 %v704
    %v756 = vunpack.c.l.b16 %v705
    %v757 = vunpack.c.h.b16 %v705
    %v758 = vunpack.c.l.b16 %v706
    %v759 = vunpack.c.h.b16 %v706
    %v760 = vunpack.c.l.b16 %v707
    %v761 = vunpack.c.h.b16 %v707
    %v762 = vunpack.c.l.b16 %v708
    %v763 = vunpack.c.h.b16 %v708
    %v764 = vunpack.c.l.b16 %v709
    %v765 = vunpack.c.h.b16 %v709
    %v766 = vunpack.c.l.b16 %v710
    %v767 = vunpack.c.h.b16 %v710
    %v768 = vunpack.c.l.b16 %v711
    %v769 = vunpack.c.h.b16 %v711
    %v770 = vunpack.c.l.b16 %v712
    %v771 = vunpack.c.h.b16 %v712
    %v772 = vunpack.c.l.b16 %v713
    %v773 = vunpack.c.h.b16 %v713
    %v774 = vpack.c.b16 %v744, %v742
    %v775 = vpack.c.b16 %v745, %v743
    %v776 = vpack.c.b16 %v748, %v746
    %v777 = vpack.c.b16 %v749, %v747
    %v778 = vpack.c.b16 %v752, %v750
    %v779 = vpack.c.b16 %v753, %v751
    %v780 = vpack.c.b16 %v756, %v754
    %v781 = vpack.c.b16 %v757, %v755
    %v782 = vpack.c.b16 %v760, %v758
    %v783 = vpack.c.b16 %v761, %v759
    %v784 = vpack.c.b16 %v764, %v762
    %v785 = vpack.c.b16 %v765, %v763
    %v786 = vpack.c.b16 %v768, %v766
    %v787 = vpack.c.b16 %v769, %v767
    %v788 = vpack.c.b16 %v772, %v770
    %v789 = vpack.c.b16 %v773, %v771
    %806 = vmatprep.subr.bf16.mxu0 %v789
    %807 = vmatpush1.bf16.msra.mxu0 %v788
    %808 = vmatprep.subr.bf16.mxu0 %v787
    %809 = vmatpush1.bf16.msra.mxu0 %v786
    %810 = vmatprep.subr.bf16.mxu0 %v785
    %811 = vmatpush1.bf16.msra.mxu0 %v784
    %812 = vmatprep.subr.bf16.mxu0 %v783
    %813 = vmatpush1.bf16.msra.mxu0 %v782
    %814 = vmatprep.subr.bf16.mxu0 %v781
    %815 = vmatpush1.bf16.msra.mxu0 %v780
    %816 = vmatprep.subr.bf16.mxu0 %v779
    %817 = vmatpush1.bf16.msra.mxu0 %v778
    %818 = vmatprep.subr.bf16.mxu0 %v777
    %819 = vmatpush1.bf16.msra.mxu0 %v776
    %820 = vmatprep.subr.bf16.mxu0 %v775
    %821 = vmatpush1.bf16.msra.mxu0 %v774
    %822 = vmatprep.subr.bf16.mxu0 0
    %823 = vmatpush2.bf16.msra.mxu0 0
    %824 = vmatprep.subr.bf16.mxu0 0
    %825 = vmatpush2.bf16.msra.mxu0 0
    %826 = vmatprep.subr.bf16.mxu0 0
    %827 = vmatpush2.bf16.msra.mxu0 0
    %828 = vmatprep.subr.bf16.mxu0 0
    %829 = vmatpush2.bf16.msra.mxu0 0
    %830 = vmatprep.subr.bf16.mxu0 0
    %831 = vmatpush2.bf16.msra.mxu0 0
    %832 = vmatprep.subr.bf16.mxu0 0
    %833 = vmatpush2.bf16.msra.mxu0 0
    %834 = vmatprep.subr.bf16.mxu0 0
    %835 = vmatpush2.bf16.msra.mxu0 0
    %836 = vmatprep.subr.bf16.mxu0 0
    %837 = vmatpush2.bf16.msra.mxu0 0
    %838 = vmatprep.mubr.bf16.mxu0 0
    %839 = vmatmul.mubr.bf16.gmra.mxu0 %v697
    %v840 = vpop.f32.mrf.mxu0
    %v841 = vadd.f32 %v719, %v840
    %v842 = vpop.f32.mrf.mxu0
    %v843 = vadd.f32 %v723, %v842
    %v844 = vpop.f32.mrf.mxu0
    %v845 = vpop.f32.mrf.mxu0
    %846 = vdwg.mxu0
    %v847 = vxor.u32 %v841, 2147483648
    %v848 = vxor.u32 %v843, 2147483648
    %v849 = vmul.f32 %v847, 1.442695
    %v850 = vpow.pop %v849
    %v851 = vmul.f32 %v848, 1.442695
    %v852 = vpow.pop %v851
    %v853 = vadd.f32 %v850, 1.0
    %v854 = vadd.f32 %v852, 1.0
    %v855 = vrcp.pop %v853
    %v856 = vmul.f32 1.0, %v855
    %v857 = vrcp.pop %v854
    %v858 = vmul.f32 1.0, %v857
    %v861 = vcombine.low %v856, %v858
    %v863 = vunpack.c.l.s4 1983009808
    %v864 = vunpack.c.0.s8 %v863
    %v865 = vlaneseq
    %v866 = vshrl.u32 %v865, 7
    %v867 = vsub.s32 %v864, %v866
    %v868 = vrot.slane %v861, %v867
    %870 = vst [vmem:[#allocation11] sm:$0xf] %v868
    // Predicated region
    $region58: #{tpu_custom_call.1} parent=1 // pred_check
      _
    $region59: #{tpu_custom_call.1} parent=1 // pred_check_branch
      %872 = sbr.rel (0) target = $region61
    $region60: #{tpu_custom_call.1} parent=1 // pred_region
      %s874 = ssub.s32 64, 64
      %875 = vsyncadd [#allocation4], %s874
      %s877 = sshll.u32 [#allocation11], 4
      %s878 = int_to_ptr.vmem [resolvable:$true] %s877
      %880 = dma.vmem_to_hbm [thread:$0]  %s878, 64, %s9, [#allocation4]
    $region61: #{tpu_custom_call.1} parent=1 // pred_fallthru
      _
    // Predicated region
    $region62: #{tpu_custom_call.1} parent=1 // pred_check
      _
    $region63: #{tpu_custom_call.1} parent=1 // pred_check_branch
      %882 = sbr.rel (0) target = $region65
    $region64: #{tpu_custom_call.1} parent=1 // pred_region
      %883 = dma.done [#allocation4], 64
    $region65: #{tpu_custom_call.1} parent=1 // pred_fallthru
      _
    %884 = vsyncpa [#allocation3], 1
    %885 = vsyncpa [#allocation6], 1
    %886 = vsyncpa [#allocation9], 1
    %887 = vsyncpa [#allocation4], 1

</llo_original>
